<compile_context>
chip_gen: v5e
topology: v5e:2x2
jax: 0.10.0
libtpu: 0.0.40
codegen_flags: <defaults>
</compile_context>

<pallas_src>
import jax
import jax.numpy as jnp
from jax.experimental import pallas as pl
from jax.experimental.pallas import tpu as pltpu

EPS = 1e-12


def _masked_tv_kernel(pred_ref, mask_ref, out_ref, carry_p, carry_m):
    ht = pl.program_id(1)

    p = pred_ref[0]                            # (C, TH, W), input dtype
    m = mask_ref[0, 0].astype(jnp.float32)     # (TH, W)
    _, TH, W = p.shape

    lane = jax.lax.broadcasted_iota(jnp.int32, (8, 128), 1)   # one vreg

    @pl.when(ht == 0)
    def _init():
        out_ref[0] = jnp.zeros((8, 128), jnp.float32)

    # Vertical diff across the row-tile boundary: previous tile's last row vs
    # this tile's first row, weighted by the previous tile's last mask row.
    @pl.when(ht > 0)
    def _boundary():
        db = jnp.sum(jnp.abs(carry_p[...] - p[:, 0:1, :]),
                     axis=0).astype(jnp.float32)               # (1, W)
        mb = carry_m[...]                                      # (1, W)
        yb = jnp.sum(db * mb)
        wb = jnp.sum(mb)
        out_ref[0] = out_ref[0] + (jnp.where(lane == 0, yb, 0.0)
                                   + jnp.where(lane == 1, wb, 0.0))

    # Save the carry for the next row tile (the boundary read happened above).
    carry_p[...] = p[:, TH - 1:TH, :]
    carry_m[...] = m[TH - 1:TH, :]

    sum_m = jnp.sum(m)

    # Horizontal (W) diffs: full-tile lane roll; subtract the wrap column.
    ph = pltpu.roll(p, shift=W - 1, axis=2)        # ph[..., w] == p[..., (w+1) % W]
    abs_h = jnp.sum(jnp.abs(p - ph), axis=0).astype(jnp.float32)   # (TH, W)
    x_num = (jnp.sum(abs_h * m)
             - jnp.sum(abs_h[:, W - 1:W] * m[:, W - 1:W]))
    wx = sum_m - jnp.sum(m[:, W - 1:W])

    # Vertical (H) diffs within the tile: sublane roll; subtract the wrap row.
    pv = pltpu.roll(p, shift=TH - 1, axis=1)       # pv[:, h, :] == p[:, (h+1) % TH, :]
    abs_v = jnp.sum(jnp.abs(p - pv), axis=0).astype(jnp.float32)   # (TH, W)
    y_num = (jnp.sum(abs_v * m)
             - jnp.sum(abs_v[TH - 1:TH, :] * m[TH - 1:TH, :]))
    wy = sum_m - jnp.sum(m[TH - 1:TH, :])

    out_ref[0] = out_ref[0] + (jnp.where(lane == 0, y_num, 0.0)
                               + jnp.where(lane == 1, wy, 0.0)
                               + jnp.where(lane == 2, x_num, 0.0)
                               + jnp.where(lane == 3, wx, 0.0))


def _choose_tile_h(C, H, W, itemsize, target_block_bytes=4 * 1024 * 1024):
    """Pick a row-tile height.

    Returns TH that is either == H (single tile per image) or a multiple of 8
    with the (C, TH, W) pred block under ~target_block_bytes, so the
    double-buffered tiles stay well inside scoped VMEM (incl. v7x's 64 MiB).
    If H has no suitable multiple-of-8 divisor, the wrapper pads H up to a
    multiple of TH (no more TH = H fallback that could blow VMEM).
    """
    row_bytes = max(1, C * W * itemsize)
    max_rows = max(8, (target_block_bytes // row_bytes) // 8 * 8)
    if H <= max_rows:
        return H
    divs = [d for d in range(8, max_rows + 1, 8) if H % d == 0]
    return max(divs) if divs else max_rows


def masked_tv_loss(pred, mask, loss_weight=1.0, tile_h=None):
    """pred: (N, C, H, W); mask: (N, 1, H, W). Returns a scalar float32 loss."""
    N, C, H, W = pred.shape
    assert mask.shape == (N, 1, H, W), (pred.shape, mask.shape)

    if tile_h is None:
        tile_h = _choose_tile_h(C, H, W, jnp.dtype(pred.dtype).itemsize)
    assert tile_h == H or tile_h % 8 == 0, tile_h

    # Pad H up to a multiple of tile_h: pred rows are edge-replicated (the
    # extra vertical diffs are exactly 0) and mask rows zero-padded (padded
    # rows contribute nothing to the numerators or the horizontal denom).
    pad_rows = (-H) % tile_h
    if pad_rows:
        pred_p = jnp.pad(pred, ((0, 0), (0, 0), (0, pad_rows), (0, 0)),
                         mode="edge")
        mask_p = jnp.pad(mask, ((0, 0), (0, 0), (0, pad_rows), (0, 0)))
    else:
        pred_p, mask_p = pred, mask
    num_ht = (H + pad_rows) // tile_h

    partials = pl.pallas_call(
        _masked_tv_kernel,
        out_shape=jax.ShapeDtypeStruct((N, 8, 128), jnp.float32),
        grid=(N, num_ht),
        in_specs=[
            pl.BlockSpec((1, C, tile_h, W), lambda n, h: (n, 0, h, 0)),
            pl.BlockSpec((1, 1, tile_h, W), lambda n, h: (n, 0, h, 0)),
        ],
        out_specs=pl.BlockSpec((1, 8, 128), lambda n, h: (n, 0, 0)),
        scratch_shapes=[
            pltpu.VMEM((C, 1, W), pred.dtype),      # carry_p (prev tile last row)
            pltpu.VMEM((1, W), jnp.float32),        # carry_m (prev tile last mask row)
        ],
        compiler_params=pltpu.CompilerParams(
            # NOTE: the ht axis must remain "arbitrary" — the carry scratch
            # and the resident output accumulator depend on it running
            # sequentially on one core per image.
            dimension_semantics=("parallel", "arbitrary"),
            vmem_limit_bytes=32 * 1024 * 1024),
    )(pred_p, mask_p)

    per_image = partials[:, 0, 0:4]                 # (N, 4) partial sums
    y_num = jnp.sum(per_image[:, 0])
    wy_sum = jnp.sum(per_image[:, 1])
    x_num = jnp.sum(per_image[:, 2])
    wx_sum = jnp.sum(per_image[:, 3])

    if pad_rows:
        # With padding, the kernel counts mask row H-1 towards the vertical
        # denominator (its numerator contribution is exactly 0 because the
        # first padded pred row is a replica of row H-1); remove it here.
        wy_sum = wy_sum - jnp.sum(mask[:, 0, H - 1, :].astype(jnp.float32))

    c = jnp.float32(C)
    y = y_num / (c * wy_sum + jnp.float32(EPS))
    x = x_num / (c * wx_sum + jnp.float32(EPS))
    return jnp.float32(loss_weight) * (x + y)


def ref_masked_tv_loss(pred, mask, loss_weight=1.0):
    """Pure-JAX reference matching the PyTorch MaskedTVLoss semantics."""
    eps = EPS
    y_abs = jnp.abs(pred[:, :, :-1, :] - pred[:, :, 1:, :])
    w_y = jnp.broadcast_to(mask[:, :, :-1, :], y_abs.shape)
    y = jnp.sum(y_abs * w_y) / (jnp.sum(w_y) + eps)
    x_abs = jnp.abs(pred[:, :, :, :-1] - pred[:, :, :, 1:])
    w_x = jnp.broadcast_to(mask[:, :, :, :-1], x_abs.shape)
    x = jnp.sum(x_abs * w_x) / (jnp.sum(w_x) + eps)
    return loss_weight * x + loss_weight * y


if __name__ == "__main__":
    key = jax.random.PRNGKey(0)

    cases = [
        # (N, C, H, W, tile_h, loss_weight)
        (2, 4, 16, 128, 8, 1.0),     # 2 row tiles/image: exercises boundary carry
        (1, 3, 24, 128, 8, 0.5),     # 3 row tiles, odd channel count
        (1, 2, 8, 128, None, 2.0),   # single tile per image (auto tile_h)
        (1, 3, 20, 128, 8, 1.0),     # H % tile_h != 0: exercises padding path
    ]
    for idx, (N, C, H, W, th, lw) in enumerate(cases):
        key, kp, km = jax.random.split(key, 3)
        pred = jax.random.normal(kp, (N, C, H, W), dtype=jnp.float32)
        mask = (jax.random.uniform(km, (N, 1, H, W)) > 0.3).astype(jnp.float32)

        loss = jax.block_until_ready(
            masked_tv_loss(pred, mask, loss_weight=lw, tile_h=th))
        ref = ref_masked_tv_loss(pred, mask, loss_weight=lw)

        assert jnp.isfinite(loss), f"case {idx}: non-finite kernel output"
        assert abs(float(loss) - float(ref)) <= 1e-4 * max(1.0, abs(float(ref))), (
            f"case {idx}: mismatch kernel={float(loss)} ref={float(ref)}")

    print("KERNEL_OK")
</pallas_src>

<mosaic_0001>
module attributes {stable_mosaic.version = 11 : i64} {
  func.func @_masked_tv_kernel(%arg0: i32, %arg1: i32, %arg2: memref<1x4x8x128xf32, #tpu.memory_space<vmem>>, %arg3: memref<1x1x8x128xf32, #tpu.memory_space<vmem>>, %arg4: memref<1x8x128xf32, #tpu.memory_space<vmem>>, %arg5: memref<4x1x128xf32, #tpu.memory_space<vmem>>, %arg6: memref<1x128xf32, #tpu.memory_space<vmem>>) attributes {dimension_semantics = [#tpu.dimension_semantics<parallel>, #tpu.dimension_semantics<arbitrary>], iteration_bounds = array<i64: 2, 2>, scalar_prefetch = 0 : i64, scratch_operands = 2 : i64, tpu.core_type = #tpu.core_type<tc>, window_params = [{transform_indices = @transform_0, window_bounds = array<i64: 1, 4, 8, 128>}, {transform_indices = @transform_1, window_bounds = array<i64: 1, 1, 8, 128>}, {transform_indices = @transform_2, window_bounds = array<i64: 1, 8, 128>}]} {
    %c0 = arith.constant 0 : index
    %c0_0 = arith.constant 0 : index
    %c0_1 = arith.constant 0 : index
    %c0_2 = arith.constant 0 : index
    %0 = vector.load %arg2[%c0, %c0_0, %c0_1, %c0_2] : memref<1x4x8x128xf32, #tpu.memory_space<vmem>>, vector<1x4x8x128xf32>
    %1 = vector.shape_cast %0 : vector<1x4x8x128xf32> to vector<4x8x128xf32>
    %c0_3 = arith.constant 0 : index
    %c0_4 = arith.constant 0 : index
    %c0_5 = arith.constant 0 : index
    %c0_6 = arith.constant 0 : index
    %2 = vector.load %arg3[%c0_3, %c0_4, %c0_5, %c0_6] : memref<1x1x8x128xf32, #tpu.memory_space<vmem>>, vector<1x1x8x128xf32>
    %3 = vector.shape_cast %2 : vector<1x1x8x128xf32> to vector<8x128xf32>
    %4 = tpu.iota {dimensions = array<i32: 1>} : vector<8x128xi32>
    %c0_i32 = arith.constant 0 : i32
    %5 = arith.cmpi eq, %arg1, %c0_i32 : i32
    %6 = arith.extui %5 : i1 to i32
    %c0_i32_7 = arith.constant 0 : i32
    %7 = arith.cmpi ne, %6, %c0_i32_7 : i32
    scf.if %7 {
      %cst_34 = arith.constant 0.000000e+00 : f32
      %94 = vector.broadcast %cst_34 : f32 to vector<8x128xf32>
      %c0_35 = arith.constant 0 : index
      %c0_36 = arith.constant 0 : index
      %c0_37 = arith.constant 0 : index
      %95 = vector.load %arg4[%c0_35, %c0_36, %c0_37] : memref<1x8x128xf32, #tpu.memory_space<vmem>>, vector<1x8x128xf32>
      %96 = vector.shape_cast %95 : vector<1x8x128xf32> to vector<8x128xf32>
      %97 = vector.shape_cast %94 : vector<8x128xf32> to vector<1x8x128xf32>
      tpu.vector_store %arg4[%c0_35, %c0_36, %c0_37], %97 {strides = array<i32>} : memref<1x8x128xf32, #tpu.memory_space<vmem>>, vector<1x8x128xf32>,
    } else {
    }
    %c0_i32_8 = arith.constant 0 : i32
    %8 = arith.cmpi sgt, %arg1, %c0_i32_8 : i32
    %9 = arith.extui %8 : i1 to i32
    %c0_i32_9 = arith.constant 0 : i32
    %10 = arith.cmpi ne, %9, %c0_i32_9 : i32
    scf.if %10 {
      %c0_34 = arith.constant 0 : index
      %c0_35 = arith.constant 0 : index
      %c0_36 = arith.constant 0 : index
      %94 = vector.load %arg5[%c0_34, %c0_35, %c0_36] : memref<4x1x128xf32, #tpu.memory_space<vmem>>, vector<4x1x128xf32>
      %95 = vector.extract_strided_slice %1 {offsets = [0, 0, 0], sizes = [4, 1, 128], strides = [1, 1, 1]} : vector<4x8x128xf32> to vector<4x1x128xf32>
      %96 = arith.subf %94, %95 : vector<4x1x128xf32>
      %97 = math.absf %96 : vector<4x1x128xf32>
      %cst_37 = arith.constant dense<0.000000e+00> : vector<1x128xf32>
      %98 = vector.multi_reduction <add>, %97, %cst_37 [0] : vector<4x1x128xf32> to vector<1x128xf32>
      %c0_38 = arith.constant 0 : index
      %c0_39 = arith.constant 0 : index
      %99 = vector.load %arg6[%c0_38, %c0_39] : memref<1x128xf32, #tpu.memory_space<vmem>>, vector<1x128xf32>
      %100 = arith.mulf %98, %99 : vector<1x128xf32>
      %101 = vector.shape_cast %100 : vector<1x128xf32> to vector<1x1x128xf32>
      %cst_40 = arith.constant dense<0.000000e+00> : vector<1xf32>
      %102 = vector.multi_reduction <add>, %101, %cst_40 [1, 2] : vector<1x1x128xf32> to vector<1xf32>
      %103 = vector.shape_cast %102 : vector<1xf32> to vector<1x1x1xf32>
      %104 = vector.extract %103[0, 0, 0] : f32 from vector<1x1x1xf32>
      %105 = vector.shape_cast %99 : vector<1x128xf32> to vector<1x1x128xf32>
      %cst_41 = arith.constant dense<0.000000e+00> : vector<1xf32>
      %106 = vector.multi_reduction <add>, %105, %cst_41 [1, 2] : vector<1x1x128xf32> to vector<1xf32>
      %107 = vector.shape_cast %106 : vector<1xf32> to vector<1x1x1xf32>
      %108 = vector.extract %107[0, 0, 0] : f32 from vector<1x1x1xf32>
      %c0_42 = arith.constant 0 : index
      %c0_43 = arith.constant 0 : index
      %c0_44 = arith.constant 0 : index
      %109 = vector.load %arg4[%c0_42, %c0_43, %c0_44] : memref<1x8x128xf32, #tpu.memory_space<vmem>>, vector<1x8x128xf32>
      %110 = vector.shape_cast %109 : vector<1x8x128xf32> to vector<8x128xf32>
      %c0_i32_45 = arith.constant 0 : i32
      %111 = vector.broadcast %c0_i32_45 : i32 to vector<8x128xi32>
      %112 = arith.cmpi eq, %4, %111 : vector<8x128xi32>
      %cst_46 = arith.constant 0.000000e+00 : f32
      %113 = vector.broadcast %104 : f32 to vector<8x128xf32>
      %114 = vector.broadcast %cst_46 : f32 to vector<8x128xf32>
      %115 = arith.select %112, %113, %114 : vector<8x128xi1>, vector<8x128xf32>
      %c1_i32_47 = arith.constant 1 : i32
      %116 = vector.broadcast %c1_i32_47 : i32 to vector<8x128xi32>
      %117 = arith.cmpi eq, %4, %116 : vector<8x128xi32>
      %cst_48 = arith.constant 0.000000e+00 : f32
      %118 = vector.broadcast %108 : f32 to vector<8x128xf32>
      %119 = vector.broadcast %cst_48 : f32 to vector<8x128xf32>
      %120 = arith.select %117, %118, %119 : vector<8x128xi1>, vector<8x128xf32>
      %121 = arith.addf %115, %120 : vector<8x128xf32>
      %122 = arith.addf %110, %121 : vector<8x128xf32>
      %c0_49 = arith.constant 0 : index
      %c0_50 = arith.constant 0 : index
      %c0_51 = arith.constant 0 : index
      %123 = vector.load %arg4[%c0_49, %c0_50, %c0_51] : memref<1x8x128xf32, #tpu.memory_space<vmem>>, vector<1x8x128xf32>
      %124 = vector.shape_cast %123 : vector<1x8x128xf32> to vector<8x128xf32>
      %125 = vector.shape_cast %122 : vector<8x128xf32> to vector<1x8x128xf32>
      tpu.vector_store %arg4[%c0_49, %c0_50, %c0_51], %125 {strides = array<i32>} : memref<1x8x128xf32, #tpu.memory_space<vmem>>, vector<1x8x128xf32>,
    } else {
    }
    %11 = vector.extract_strided_slice %1 {offsets = [0, 7, 0], sizes = [4, 1, 128], strides = [1, 1, 1]} : vector<4x8x128xf32> to vector<4x1x128xf32>
    %c0_10 = arith.constant 0 : index
    %c0_11 = arith.constant 0 : index
    %c0_12 = arith.constant 0 : index
    %12 = vector.load %arg5[%c0_10, %c0_11, %c0_12] : memref<4x1x128xf32, #tpu.memory_space<vmem>>, vector<4x1x128xf32>
    tpu.vector_store %arg5[%c0_10, %c0_11, %c0_12], %11 {strides = array<i32>} : memref<4x1x128xf32, #tpu.memory_space<vmem>>, vector<4x1x128xf32>,
    %13 = vector.extract_strided_slice %3 {offsets = [7, 0], sizes = [1, 128], strides = [1, 1]} : vector<8x128xf32> to vector<1x128xf32>
    %c0_13 = arith.constant 0 : index
    %c0_14 = arith.constant 0 : index
    %14 = vector.load %arg6[%c0_13, %c0_14] : memref<1x128xf32, #tpu.memory_space<vmem>>, vector<1x128xf32>
    tpu.vector_store %arg6[%c0_13, %c0_14], %13 {strides = array<i32>} : memref<1x128xf32, #tpu.memory_space<vmem>>, vector<1x128xf32>,
    %15 = vector.shape_cast %3 : vector<8x128xf32> to vector<1x8x128xf32>
    %cst = arith.constant dense<0.000000e+00> : vector<1xf32>
    %16 = vector.multi_reduction <add>, %15, %cst [1, 2] : vector<1x8x128xf32> to vector<1xf32>
    %17 = vector.shape_cast %16 : vector<1xf32> to vector<1x1x1xf32>
    %18 = vector.extract %17[0, 0, 0] : f32 from vector<1x1x1xf32>
    %c127_i32 = arith.constant 127 : i32
    %19 = tpu.dynamic_rotate %1 by %c127_i32 dim 2 : vector<4x8x128xf32>, i32 -> vector<4x8x128xf32>
    %20 = arith.subf %1, %19 : vector<4x8x128xf32>
    %21 = math.absf %20 : vector<4x8x128xf32>
    %cst_15 = arith.constant dense<0.000000e+00> : vector<8x128xf32>
    %22 = vector.multi_reduction <add>, %21, %cst_15 [0] : vector<4x8x128xf32> to vector<8x128xf32>
    %23 = arith.mulf %22, %3 : vector<8x128xf32>
    %24 = vector.shape_cast %23 : vector<8x128xf32> to vector<1x8x128xf32>
    %cst_16 = arith.constant dense<0.000000e+00> : vector<1xf32>
    %25 = vector.multi_reduction <add>, %24, %cst_16 [1, 2] : vector<1x8x128xf32> to vector<1xf32>
    %26 = vector.shape_cast %25 : vector<1xf32> to vector<1x1x1xf32>
    %27 = vector.extract %26[0, 0, 0] : f32 from vector<1x1x1xf32>
    %28 = vector.extract_strided_slice %22 {offsets = [0, 127], sizes = [8, 1], strides = [1, 1]} : vector<8x128xf32> to vector<8x1xf32>
    %29 = vector.extract_strided_slice %3 {offsets = [0, 127], sizes = [8, 1], strides = [1, 1]} : vector<8x128xf32> to vector<8x1xf32>
    %30 = arith.mulf %28, %29 : vector<8x1xf32>
    %31 = vector.shape_cast %30 : vector<8x1xf32> to vector<1x8x1xf32>
    %cst_17 = arith.constant dense<0.000000e+00> : vector<1xf32>
    %32 = vector.multi_reduction <add>, %31, %cst_17 [1, 2] : vector<1x8x1xf32> to vector<1xf32>
    %33 = vector.shape_cast %32 : vector<1xf32> to vector<1x1x1xf32>
    %34 = vector.extract %33[0, 0, 0] : f32 from vector<1x1x1xf32>
    %35 = arith.subf %27, %34 : f32
    %36 = vector.extract_strided_slice %3 {offsets = [0, 127], sizes = [8, 1], strides = [1, 1]} : vector<8x128xf32> to vector<8x1xf32>
    %37 = vector.shape_cast %36 : vector<8x1xf32> to vector<1x8x1xf32>
    %cst_18 = arith.constant dense<0.000000e+00> : vector<1xf32>
    %38 = vector.multi_reduction <add>, %37, %cst_18 [1, 2] : vector<1x8x1xf32> to vector<1xf32>
    %39 = vector.shape_cast %38 : vector<1xf32> to vector<1x1x1xf32>
    %40 = vector.extract %39[0, 0, 0] : f32 from vector<1x1x1xf32>
    %41 = arith.subf %18, %40 : f32
    %c7_i32 = arith.constant 7 : i32
    %42 = tpu.dynamic_rotate %1 by %c7_i32 dim 1 : vector<4x8x128xf32>, i32 -> vector<4x8x128xf32>
    %43 = arith.subf %1, %42 : vector<4x8x128xf32>
    %44 = math.absf %43 : vector<4x8x128xf32>
    %cst_19 = arith.constant dense<0.000000e+00> : vector<8x128xf32>
    %45 = vector.multi_reduction <add>, %44, %cst_19 [0] : vector<4x8x128xf32> to vector<8x128xf32>
    %46 = arith.mulf %45, %3 : vector<8x128xf32>
    %47 = vector.shape_cast %46 : vector<8x128xf32> to vector<1x8x128xf32>
    %cst_20 = arith.constant dense<0.000000e+00> : vector<1xf32>
    %48 = vector.multi_reduction <add>, %47, %cst_20 [1, 2] : vector<1x8x128xf32> to vector<1xf32>
    %49 = vector.shape_cast %48 : vector<1xf32> to vector<1x1x1xf32>
    %50 = vector.extract %49[0, 0, 0] : f32 from vector<1x1x1xf32>
    %51 = vector.extract_strided_slice %45 {offsets = [7, 0], sizes = [1, 128], strides = [1, 1]} : vector<8x128xf32> to vector<1x128xf32>
    %52 = vector.extract_strided_slice %3 {offsets = [7, 0], sizes = [1, 128], strides = [1, 1]} : vector<8x128xf32> to vector<1x128xf32>
    %53 = arith.mulf %51, %52 : vector<1x128xf32>
    %54 = vector.shape_cast %53 : vector<1x128xf32> to vector<1x1x128xf32>
    %cst_21 = arith.constant dense<0.000000e+00> : vector<1xf32>
    %55 = vector.multi_reduction <add>, %54, %cst_21 [1, 2] : vector<1x1x128xf32> to vector<1xf32>
    %56 = vector.shape_cast %55 : vector<1xf32> to vector<1x1x1xf32>
    %57 = vector.extract %56[0, 0, 0] : f32 from vector<1x1x1xf32>
    %58 = arith.subf %50, %57 : f32
    %59 = vector.extract_strided_slice %3 {offsets = [7, 0], sizes = [1, 128], strides = [1, 1]} : vector<8x128xf32> to vector<1x128xf32>
    %60 = vector.shape_cast %59 : vector<1x128xf32> to vector<1x1x128xf32>
    %cst_22 = arith.constant dense<0.000000e+00> : vector<1xf32>
    %61 = vector.multi_reduction <add>, %60, %cst_22 [1, 2] : vector<1x1x128xf32> to vector<1xf32>
    %62 = vector.shape_cast %61 : vector<1xf32> to vector<1x1x1xf32>
    %63 = vector.extract %62[0, 0, 0] : f32 from vector<1x1x1xf32>
    %64 = arith.subf %18, %63 : f32
    %c0_23 = arith.constant 0 : index
    %c0_24 = arith.constant 0 : index
    %c0_25 = arith.constant 0 : index
    %65 = vector.load %arg4[%c0_23, %c0_24, %c0_25] : memref<1x8x128xf32, #tpu.memory_space<vmem>>, vector<1x8x128xf32>
    %66 = vector.shape_cast %65 : vector<1x8x128xf32> to vector<8x128xf32>
    %c0_i32_26 = arith.constant 0 : i32
    %67 = vector.broadcast %c0_i32_26 : i32 to vector<8x128xi32>
    %68 = arith.cmpi eq, %4, %67 : vector<8x128xi32>
    %cst_27 = arith.constant 0.000000e+00 : f32
    %69 = vector.broadcast %58 : f32 to vector<8x128xf32>
    %70 = vector.broadcast %cst_27 : f32 to vector<8x128xf32>
    %71 = arith.select %68, %69, %70 : vector<8x128xi1>, vector<8x128xf32>
    %c1_i32 = arith.constant 1 : i32
    %72 = vector.broadcast %c1_i32 : i32 to vector<8x128xi32>
    %73 = arith.cmpi eq, %4, %72 : vector<8x128xi32>
    %cst_28 = arith.constant 0.000000e+00 : f32
    %74 = vector.broadcast %64 : f32 to vector<8x128xf32>
    %75 = vector.broadcast %cst_28 : f32 to vector<8x128xf32>
    %76 = arith.select %73, %74, %75 : vector<8x128xi1>, vector<8x128xf32>
    %77 = arith.addf %71, %76 : vector<8x128xf32>
    %c2_i32 = arith.constant 2 : i32
    %78 = vector.broadcast %c2_i32 : i32 to vector<8x128xi32>
    %79 = arith.cmpi eq, %4, %78 : vector<8x128xi32>
    %cst_29 = arith.constant 0.000000e+00 : f32
    %80 = vector.broadcast %35 : f32 to vector<8x128xf32>
    %81 = vector.broadcast %cst_29 : f32 to vector<8x128xf32>
    %82 = arith.select %79, %80, %81 : vector<8x128xi1>, vector<8x128xf32>
    %83 = arith.addf %77, %82 : vector<8x128xf32>
    %c3_i32 = arith.constant 3 : i32
    %84 = vector.broadcast %c3_i32 : i32 to vector<8x128xi32>
    %85 = arith.cmpi eq, %4, %84 : vector<8x128xi32>
    %cst_30 = arith.constant 0.000000e+00 : f32
    %86 = vector.broadcast %41 : f32 to vector<8x128xf32>
    %87 = vector.broadcast %cst_30 : f32 to vector<8x128xf32>
    %88 = arith.select %85, %86, %87 : vector<8x128xi1>, vector<8x128xf32>
    %89 = arith.addf %83, %88 : vector<8x128xf32>
    %90 = arith.addf %66, %89 : vector<8x128xf32>
    %c0_31 = arith.constant 0 : index
    %c0_32 = arith.constant 0 : index
    %c0_33 = arith.constant 0 : index
    %91 = vector.load %arg4[%c0_31, %c0_32, %c0_33] : memref<1x8x128xf32, #tpu.memory_space<vmem>>, vector<1x8x128xf32>
    %92 = vector.shape_cast %91 : vector<1x8x128xf32> to vector<8x128xf32>
    %93 = vector.shape_cast %90 : vector<8x128xf32> to vector<1x8x128xf32>
    tpu.vector_store %arg4[%c0_31, %c0_32, %c0_33], %93 {strides = array<i32>} : memref<1x8x128xf32, #tpu.memory_space<vmem>>, vector<1x8x128xf32>,
    return
  }
  func.func @transform_0(%arg0: i32, %arg1: i32) -> (i32, i32, i32, i32) {
    %c0_i32 = arith.constant 0 : i32
    %c0_i32_0 = arith.constant 0 : i32
    %c0_i32_1 = arith.constant 0 : i32
    return %arg0, %c0_i32, %arg1, %c0_i32_0 : i32, i32, i32, i32
  }
  func.func @transform_1(%arg0: i32, %arg1: i32) -> (i32, i32, i32, i32) {
    %c0_i32 = arith.constant 0 : i32
    %c0_i32_0 = arith.constant 0 : i32
    %c0_i32_1 = arith.constant 0 : i32
    return %arg0, %c0_i32, %arg1, %c0_i32_0 : i32, i32, i32, i32
  }
  func.func @transform_2(%arg0: i32, %arg1: i32) -> (i32, i32, i32) {
    %c0_i32 = arith.constant 0 : i32
    %c0_i32_0 = arith.constant 0 : i32
    %c0_i32_1 = arith.constant 0 : i32
    return %arg0, %c0_i32, %c0_i32_0 : i32, i32, i32
  }
}

</mosaic_0001>

<llo_original>
// kernel: tpu_custom_call.1
$region0: #{tpu_custom_call.1}
  #allocation0 [shape = 'u32[]', space=smem, size = 0x4, offset = 0x4, fixed_abs, tag = 'smem constant byte address 0x4 - core index']
  #allocation1 [shape = 'u32[72,128]{1,0:T(1,128)}', space=vmem, size = 0x9000, scoped, tag = 'internal scratch']
  #allocation2 [shape = 'f32[4,1,128]{2,1,0:T(1,128)}', space=vmem, size = 0x800, scoped, tag = 'scratch operand']
  #allocation3 [shape = 'f32[1,128]{1,0:T(1,128)}', space=vmem, size = 0x200, scoped, tag = 'scratch operand']
  %s0 = inlined_call_operand.hbm [shape: f32[2,4,16,128], index: 0, kind: input, shape index: {}]
  %s1 = inlined_call_operand.hbm [shape: f32[2,1,16,128], index: 1, kind: input, shape index: {}]
  %s2 = inlined_call_operand.hbm [shape: f32[2,8,128], index: 2, kind: output, shape index: {}]
  %s3 = sld [smem:[#allocation0]]
  $region57: #{tpu_custom_call.1} parent=0
    _
  %s5 = ssub.s32 1, %s3
  %s6 = scalar_select 0, %s5, %s3
  $region1: #{tpu_custom_call.1} parent=0
    #allocation4 [shape = 'u8[32768]{0}', space=vmem, size = 0x8000, scoped, tag = 'input window, operand 0']
    #allocation5 [shape = 's32[2]{0}', space=sflag, size = 0x8, scoped, tag = 'scoped memory for tpu_custom_call.1']
    #allocation6 [shape = 's32[2]{0}', space=sflag, size = 0x8, scoped, tag = 'scoped memory for tpu_custom_call.1']
    #allocation7 [shape = 'u8[8192]{0}', space=vmem, size = 0x2000, scoped, tag = 'input window, operand 1']
    #allocation8 [shape = 's32[2]{0}', space=sflag, size = 0x8, scoped, tag = 'scoped memory for tpu_custom_call.1']
    #allocation9 [shape = 'u8[8192]{0}', space=vmem, size = 0x2000, scoped, tag = 'output window, operand 0']
    %7 = vsyncpa [#allocation5], 0
    %s8 = scalar_lea.sflag [#allocation5], 1
    %9 = vsyncpa %s8, 0
    %10 = vsyncpa [#allocation8], 0
    %s11 = scalar_lea.sflag [#allocation8], 1
    %12 = vsyncpa %s11, 0
    %13 = vsyncpa [#allocation6], 0
    %s14 = scalar_lea.sflag [#allocation6], 1
    %15 = vsyncpa %s14, 0
    loop: start=0, step=1, limit=6
    $region2: #{tpu_custom_call.1} parent=1 // loop_pre_header
      _
    $region3: #{tpu_custom_call.1} parent=1 // loop_header
      %s17 = sphi 0, %s21
      %p18 = scmp.ge.s32.totalorder %s17, 6
      %s24 = sphi 0, %s36
      %s25 = sphi 0, %s32
      %s26 = sphi 0, %s24
      %s27 = sphi 0, %s25
      %s28 = sphi 0, %s26
      %s29 = sphi 0, %s27
      %s41 = sphi 0, %s43
      %s44 = sphi 0, %s41
      %s45 = sphi 0, %s44
      %s61 = sphi 0, %s45
      %s69 = sphi 0, %s71
      %s72 = sphi 0, %s69
      %s73 = sphi 0, %s72
      %s89 = sphi 0, %s73
      %s95 = sphi 0, %s97
      %s98 = sphi 0, %s95
      %s99 = sphi 0, %s98
      %s115 = sphi 0, %s99
    $region4: #{tpu_custom_call.1} parent=1 // loop_header_branch
      %20 = sbr.rel (%p18) target = $region8
    $region5: #{tpu_custom_call.1} parent=1 // loop_body
      %s22 = ssub.s32 %s17, 1
      %s23 = ssub.s32 %s17, 2
      %s30 = sadd.s32 1, %s25
      %p31 = scmp.ge.s32.totalorder %s30, 2
      %s32 = scalar_select %p31, 0, %s30
      %s33 = sadd.s32 1, %s24
      %s34 = scalar_select %p31, %s33, %s24
      %p35 = scmp.ge.s32.totalorder %s34, 2
      %s36 = scalar_select %p35, 0, %s34
      %s37 = ssub.s32 %s24, %s36
      %s38 = ssub.s32 %s25, %s32
      %s39 = sor.u32 %s37, %s38
      %p40 = scmp.eq.s32.totalorder %s39, 0
      %s42 = sadd.s32 %s41, 1
      %s43 = scalar_select %p40, %s41, %s42
      %p46 = pneg %p40
      %p47 = scmp.eq.s32.totalorder %s17, 3
      %p48 = por %p46, %p47
      %p49 = scmp.ne.s32.totalorder %s41, %s44
      %p50 = scmp.eq.s32.totalorder %s17, 0
      %p51 = por %p49, %p50
      %p52 = scmp.ne.s32.totalorder %s41, %s44
      %p53 = scmp.eq.s32.totalorder %s22, 3
      %p54 = por %p52, %p53
      %p55 = scmp.ne.s32.totalorder %s44, %s45
      %p56 = scmp.eq.s32.totalorder %s22, 0
      %p57 = por %p55, %p56
      %p58 = scmp.ne.s32.totalorder %s44, %s45
      %p59 = scmp.eq.s32.totalorder %s23, 3
      %p60 = por %p58, %p59
      %p62 = scmp.ne.s32.totalorder %s45, %s61
      %p63 = scmp.eq.s32.totalorder %s23, 0
      %p64 = por %p62, %p63
      %s65 = ssub.s32 %s24, %s36
      %s66 = ssub.s32 %s25, %s32
      %s67 = sor.u32 %s65, %s66
      %p68 = scmp.eq.s32.totalorder %s67, 0
      %s70 = sadd.s32 %s69, 1
      %s71 = scalar_select %p68, %s69, %s70
      %p74 = pneg %p68
      %p75 = scmp.eq.s32.totalorder %s17, 3
      %p76 = por %p74, %p75
      %p77 = scmp.ne.s32.totalorder %s69, %s72
      %p78 = scmp.eq.s32.totalorder %s17, 0
      %p79 = por %p77, %p78
      %p80 = scmp.ne.s32.totalorder %s69, %s72
      %p81 = scmp.eq.s32.totalorder %s22, 3
      %p82 = por %p80, %p81
      %p83 = scmp.ne.s32.totalorder %s72, %s73
      %p84 = scmp.eq.s32.totalorder %s22, 0
      %p85 = por %p83, %p84
      %p86 = scmp.ne.s32.totalorder %s72, %s73
      %p87 = scmp.eq.s32.totalorder %s23, 3
      %p88 = por %p86, %p87
      %p90 = scmp.ne.s32.totalorder %s73, %s89
      %p91 = scmp.eq.s32.totalorder %s23, 0
      %p92 = por %p90, %p91
      %s93 = ssub.s32 %s24, %s36
      %p94 = scmp.eq.s32.totalorder %s93, 0
      %s96 = sadd.s32 %s95, 1
      %s97 = scalar_select %p94, %s95, %s96
      %p100 = pneg %p94
      %p101 = scmp.eq.s32.totalorder %s17, 3
      %p102 = por %p100, %p101
      %p103 = scmp.ne.s32.totalorder %s95, %s98
      %p104 = scmp.eq.s32.totalorder %s17, 0
      %p105 = por %p103, %p104
      %p106 = scmp.ne.s32.totalorder %s95, %s98
      %p107 = scmp.eq.s32.totalorder %s22, 3
      %p108 = por %p106, %p107
      %p109 = scmp.ne.s32.totalorder %s98, %s99
      %p110 = scmp.eq.s32.totalorder %s22, 0
      %p111 = por %p109, %p110
      %p112 = scmp.ne.s32.totalorder %s98, %s99
      %p113 = scmp.eq.s32.totalorder %s23, 3
      %p114 = por %p112, %p113
      %p116 = scmp.ne.s32.totalorder %s99, %s115
      %p117 = scmp.eq.s32.totalorder %s23, 0
      %p118 = por %p116, %p117
      %p119 = scmp.le.s32.totalorder 1, %s17
      %p120 = scmp.lt.s32.totalorder %s17, 5
      %p121 = pnand %p119, %p120
      %p122 = pneg %p121
      // Predicated region
      $region9: #{tpu_custom_call.1} parent=5 // pred_check
        _
      $region10: #{tpu_custom_call.1} parent=5 // pred_check_branch
        %124 = sbr.rel (%p121) target = $region12
      $region11: #{tpu_custom_call.1} parent=5 // pred_region
        %s125 = ssub.s32 %s17, 1
      $region12: #{tpu_custom_call.1} parent=5 // pred_fallthru
        _
      %p126 = scmp.lt.s32.totalorder %s17, 4
      // Predicated region
      $region13: #{tpu_custom_call.1} parent=5 // pred_check
        %p127 = pneg %p126
      $region14: #{tpu_custom_call.1} parent=5 // pred_check_branch
        %129 = sbr.rel (%p127) target = $region16
      $region15: #{tpu_custom_call.1} parent=5 // pred_region
        // Predicated region
        $region17: #{tpu_custom_call.1} parent=15 // pred_check
          %p130 = pneg %p51
        $region18: #{tpu_custom_call.1} parent=15 // pred_check_branch
          %132 = sbr.rel (%p130) target = $region20
        $region19: #{tpu_custom_call.1} parent=15 // pred_region
          %s133 = sand.u32 %s41, 1
          %s134 = scalar_lea.sflag [#allocation5], %s133
          %s135 = sand.u32 %s41, 1
          %s136 = smul.addr %s135, 32
          %s137 = scalar_lea.vmem [#allocation4], %s136
          %139 = vsyncadd %s134, 0
          %s140 = smul.addr %s24, 8
          %s141 = sadd.s32 %s25, %s140
          %s142 = smul.addr %s141, 8
          %s143 = scalar_lea.hbm %s0, %s142
          %s144 = sshll.u32 %s143, 4
          %s145 = int_to_ptr.hbm [resolvable:$true] %s144
          %s146 = sshll.u32 %s137, 4
          %s147 = int_to_ptr.vmem [resolvable:$true] %s146
          %152 = dma.hbm_to_vmem [thread:$0]  %s145, 512, %s147, %s134, 256, 128, 8
        $region20: #{tpu_custom_call.1} parent=15 // pred_fallthru
          _
        // Predicated region
        $region21: #{tpu_custom_call.1} parent=15 // pred_check
          %p153 = pneg %p79
        $region22: #{tpu_custom_call.1} parent=15 // pred_check_branch
          %155 = sbr.rel (%p153) target = $region24
        $region23: #{tpu_custom_call.1} parent=15 // pred_region
          %s156 = sand.u32 %s69, 1
          %s157 = scalar_lea.sflag [#allocation8], %s156
          %s158 = sand.u32 %s69, 1
          %s159 = smul.addr %s158, 8
          %s160 = scalar_lea.vmem [#allocation7], %s159
          %162 = vsyncadd %s157, 0
          %s163 = smul.addr %s24, 2
          %s164 = sadd.s32 %s25, %s163
          %s165 = smul.addr %s164, 8
          %s166 = scalar_lea.hbm %s1, %s165
          %s168 = sshll.u32 %s166, 4
          %s169 = int_to_ptr.hbm [resolvable:$true] %s168
          %s170 = sshll.u32 %s160, 4
          %s171 = int_to_ptr.vmem [resolvable:$true] %s170
          %173 = dma.hbm_to_vmem [thread:$0]  %s169, 128, %s171, %s157
        $region24: #{tpu_custom_call.1} parent=15 // pred_fallthru
          _
      $region16: #{tpu_custom_call.1} parent=5 // pred_fallthru
        _
      %p174 = scmp.le.s32.totalorder 1, %s17
      %p175 = scmp.lt.s32.totalorder %s17, 5
      %p176 = pnand %p174, %p175
      %p177 = pneg %p176
      // Predicated region
      $region25: #{tpu_custom_call.1} parent=5 // pred_check
        _
      $region26: #{tpu_custom_call.1} parent=5 // pred_check_branch
        %179 = sbr.rel (%p176) target = $region28
      $region27: #{tpu_custom_call.1} parent=5 // pred_region
        %s180 = ssub.s32 %s17, 1
        %s181 = sand.u32 %s44, 1
        %s182 = scalar_lea.sflag [#allocation5], %s181
        %s183 = sand.u32 %s44, 1
        %s184 = smul.addr %s183, 32
        %s185 = scalar_lea.vmem [#allocation4], %s184
        // Predicated region
        $region29: #{tpu_custom_call.1} parent=27 // pred_check
          %p186 = pneg %p57
        $region30: #{tpu_custom_call.1} parent=27 // pred_check_branch
          %188 = sbr.rel (%p186) target = $region32
        $region31: #{tpu_custom_call.1} parent=27 // pred_region
          %190 = dma.done %s182, 512
        $region32: #{tpu_custom_call.1} parent=27 // pred_fallthru
          _
        %s191 = sand.u32 %s72, 1
        %s192 = scalar_lea.sflag [#allocation8], %s191
        %s193 = sand.u32 %s72, 1
        %s194 = smul.addr %s193, 8
        %s195 = scalar_lea.vmem [#allocation7], %s194
        // Predicated region
        $region33: #{tpu_custom_call.1} parent=27 // pred_check
          %p196 = pneg %p85
        $region34: #{tpu_custom_call.1} parent=27 // pred_check_branch
          %198 = sbr.rel (%p196) target = $region36
        $region35: #{tpu_custom_call.1} parent=27 // pred_region
          %200 = dma.done %s192, 128
        $region36: #{tpu_custom_call.1} parent=27 // pred_fallthru
          _
        %s201 = sand.u32 %s44, 1
        %s202 = scalar_lea.sflag [#allocation5], %s201
        %s203 = sand.u32 %s44, 1
        %s204 = smul.addr %s203, 32
        %s205 = scalar_lea.vmem [#allocation4], %s204
        %p206 = pneg %p57
        %p207 = pneg %p54
        %s208 = sand.u32 %s72, 1
        %s209 = scalar_lea.sflag [#allocation8], %s208
        %s210 = sand.u32 %s72, 1
        %s211 = smul.addr %s210, 8
        %s212 = scalar_lea.vmem [#allocation7], %s211
        %p213 = pneg %p85
        %p214 = pneg %p82
        %p215 = pneg %p111
        %p216 = pneg %p108
        %s217 = sand.u32 %s98, 1
        %s218 = scalar_lea.sflag [#allocation6], %s217
        %s219 = sand.u32 %s98, 1
        %s220 = smul.addr %s219, 8
        %s221 = scalar_lea.vmem [#allocation9], %s220
        %v222 = vld [vmem:[%s185] sm:$0xff]
        %v223 = vld [vmem:[%s185 + $0x8] sm:$0xff]
        %v224 = vld [vmem:[%s185 + $0x10] sm:$0xff]
        %v225 = vld [vmem:[%s185 + $0x18] sm:$0xff]
        %v226 = vld [vmem:[%s195] sm:$0xff]
        %v227 = vlaneseq
        %v228 = vand.u32 %v227, 127
        %p229 = scmp.eq.s32.totalorder %s27, 0
        // Predicated region
        $region37: #{tpu_custom_call.1} parent=27 // pred_check
          %p230 = pneg %p229
        $region38: #{tpu_custom_call.1} parent=27 // pred_check_branch
          %232 = sbr.rel (%p230) target = $region40
        $region39: #{tpu_custom_call.1} parent=27 // pred_region
          %233 = vst [vmem:[%s221] sm:$0xff] 0.0
        $region40: #{tpu_custom_call.1} parent=27 // pred_fallthru
          _
        %p234 = scmp.gt.s32.totalorder %s27, 0
        // Predicated region
        $region41: #{tpu_custom_call.1} parent=27 // pred_check
          %p235 = pneg %p234
        $region42: #{tpu_custom_call.1} parent=27 // pred_check_branch
          %237 = sbr.rel (%p235) target = $region44
        $region43: #{tpu_custom_call.1} parent=27 // pred_region
          %v238 = vld [vmem:[#allocation2] sm:$0x1]
          %v239 = vld [vmem:[#allocation2 + $0x1] sm:$0x1]
          %v240 = vld [vmem:[#allocation2 + $0x2] sm:$0x1]
          %v241 = vld [vmem:[#allocation2 + $0x3] sm:$0x1]
          %v242 = vsub.f32 %v238, %v222
          %v243 = vsub.f32 %v239, %v223
          %v244 = vsub.f32 %v240, %v224
          %v245 = vsub.f32 %v241, %v225
          %v246 = vand.u32 2147483647, %v242
          %v247 = vand.u32 2147483647, %v243
          %v248 = vand.u32 2147483647, %v244
          %v249 = vand.u32 2147483647, %v245
          %vm250 = vcmask 1040384
          %v251 = vsel %vm250, %v246, 0.0
          %v252 = vsel %vm250, %v247, 0.0
          %v253 = vadd.f32 %v251, %v252
          %v254 = vsel %vm250, %v248, 0.0
          %v255 = vadd.f32 %v253, %v254
          %v256 = vsel %vm250, %v249, 0.0
          %v257 = vadd.f32 %v255, %v256
          %v258 = vld [vmem:[#allocation3] sm:$0x1]
          %v259 = vmul.f32 %v257, %v258
          %v260 = vsel %vm250, %v259, 0.0
          %261 = vadd.xlane.f32.xlu0 %v260
          %v262 = vpop.xlane.xlu0 %261
          %v263 = vrot.slane %v262, 4
          %v264 = vadd.f32 %v262, %v263
          %v265 = vrot.slane %v264, 2
          %v266 = vadd.f32 %v264, %v265
          %v267 = vrot.slane %v266, 1
          %v268 = vadd.f32 %v266, %v267
          %s269 = vtos %v268
          %v270 = vsel %vm250, %v258, 0.0
          %271 = vadd.xlane.f32.xlu0 %v270
          %v272 = vpop.xlane.xlu0 %271
          %v273 = vrot.slane %v272, 4
          %v274 = vadd.f32 %v272, %v273
          %v275 = vrot.slane %v274, 2
          %v276 = vadd.f32 %v274, %v275
          %v277 = vrot.slane %v276, 1
          %v278 = vadd.f32 %v276, %v277
          %s279 = vtos %v278
          %v280 = vld [vmem:[%s221] sm:$0xff]
          %vm281 = vcmp.eq.s32.totalorder %v228, 0
          %v282 = vstv %s269
          %v283 = vsel %vm281, %v282, 0.0
          %vm284 = vcmp.eq.s32.totalorder %v228, 1
          %v285 = vstv %s279
          %v286 = vsel %vm284, %v285, 0.0
          %v287 = vadd.f32 %v283, %v286
          %v288 = vadd.f32 %v280, %v287
          %289 = vst [vmem:[%s221] sm:$0xff] %v288
        $region44: #{tpu_custom_call.1} parent=27 // pred_fallthru
          _
        %290 = vst [vmem:[#allocation2 - $0x7] sm:$0x80] %v222
        %291 = vst [vmem:[#allocation2 - $0x6] sm:$0x80] %v223
        %292 = vst [vmem:[#allocation2 - $0x5] sm:$0x80] %v224
        %293 = vst [vmem:[#allocation2 - $0x4] sm:$0x80] %v225
        %294 = vst [vmem:[#allocation3 - $0x7] sm:$0x80] %v226
        %295 = vadd.xlane.f32.xlu0 %v226
        %v296 = vpop.xlane.xlu0 %295
        %v297 = vrot.slane %v296, 4
        %v298 = vadd.f32 %v296, %v297
        %v299 = vrot.slane %v298, 2
        %v300 = vadd.f32 %v298, %v299
        %v301 = vrot.slane %v300, 1
        %v302 = vadd.f32 %v300, %v301
        %s303 = vtos %v302
        %304 = vrot.lane.b32.xlu0 %v222, 127
        %v305 = vpop.permute.xlu0 %304
        %306 = vrot.lane.b32.xlu0 %v223, 127
        %v307 = vpop.permute.xlu0 %306
        %308 = vrot.lane.b32.xlu0 %v224, 127
        %v309 = vpop.permute.xlu0 %308
        %310 = vrot.lane.b32.xlu0 %v225, 127
        %v311 = vpop.permute.xlu0 %310
        %v312 = vsub.f32 %v222, %v305
        %v313 = vsub.f32 %v223, %v307
        %v314 = vsub.f32 %v224, %v309
        %v315 = vsub.f32 %v225, %v311
        %v316 = vand.u32 2147483647, %v312
        %v317 = vand.u32 2147483647, %v313
        %v318 = vand.u32 2147483647, %v314
        %v319 = vand.u32 2147483647, %v315
        %v320 = vadd.f32 %v316, %v317
        %v321 = vadd.f32 %v320, %v318
        %v322 = vadd.f32 %v321, %v319
        %v323 = vmul.f32 %v322, %v226
        %324 = vadd.xlane.f32.xlu0 %v323
        %v325 = vpop.xlane.xlu0 %324
        %v326 = vrot.slane %v325, 4
        %v327 = vadd.f32 %v325, %v326
        %v328 = vrot.slane %v327, 2
        %v329 = vadd.f32 %v327, %v328
        %v330 = vrot.slane %v329, 1
        %v331 = vadd.f32 %v329, %v330
        %s332 = vtos %v331
        %334 = vrot.lane.b32.xlu0 %v323, 1
        %v335 = vpop.permute.xlu0 %334
        %vm337 = vcmask 7168
        %v338 = vsel %vm337, %v335, 0.0
        %339 = vadd.xlane.f32.xlu0 %v338
        %v340 = vpop.xlane.xlu0 %339
        %v341 = vrot.slane %v340, 4
        %v342 = vadd.f32 %v340, %v341
        %v343 = vrot.slane %v342, 2
        %v344 = vadd.f32 %v342, %v343
        %v345 = vrot.slane %v344, 1
        %v346 = vadd.f32 %v344, %v345
        %s347 = vtos %v346
        %s348 = ssub.f32 %s332, %s347
        %350 = vrot.lane.b32.xlu0 %v226, 1
        %v351 = vpop.permute.xlu0 %350
        %v353 = vsel %vm337, %v351, 0.0
        %354 = vadd.xlane.f32.xlu0 %v353
        %v355 = vpop.xlane.xlu0 %354
        %v356 = vrot.slane %v355, 4
        %v357 = vadd.f32 %v355, %v356
        %v358 = vrot.slane %v357, 2
        %v359 = vadd.f32 %v357, %v358
        %v360 = vrot.slane %v359, 1
        %v361 = vadd.f32 %v359, %v360
        %s362 = vtos %v361
        %s363 = ssub.f32 %s303, %s362
        %v364 = vrot.slane %v222, 1
        %v365 = vrot.slane %v223, 1
        %v366 = vrot.slane %v224, 1
        %v367 = vrot.slane %v225, 1
        %v368 = vsub.f32 %v222, %v364
        %v369 = vsub.f32 %v223, %v365
        %v370 = vsub.f32 %v224, %v366
        %v371 = vsub.f32 %v225, %v367
        %v372 = vand.u32 2147483647, %v368
        %v373 = vand.u32 2147483647, %v369
        %v374 = vand.u32 2147483647, %v370
        %v375 = vand.u32 2147483647, %v371
        %v376 = vadd.f32 %v372, %v373
        %v377 = vadd.f32 %v376, %v374
        %v378 = vadd.f32 %v377, %v375
        %v379 = vmul.f32 %v378, %v226
        %380 = vadd.xlane.f32.xlu0 %v379
        %v381 = vpop.xlane.xlu0 %380
        %v382 = vrot.slane %v381, 4
        %v383 = vadd.f32 %v381, %v382
        %v384 = vrot.slane %v383, 2
        %v385 = vadd.f32 %v383, %v384
        %v386 = vrot.slane %v385, 1
        %v387 = vadd.f32 %v385, %v386
        %s388 = vtos %v387
        %v390 = vrot.slane %v379, 7
        %vm392 = vcmask 1040384
        %v393 = vsel %vm392, %v390, 0.0
        %394 = vadd.xlane.f32.xlu0 %v393
        %v395 = vpop.xlane.xlu0 %394
        %v396 = vrot.slane %v395, 4
        %v397 = vadd.f32 %v395, %v396
        %v398 = vrot.slane %v397, 2
        %v399 = vadd.f32 %v397, %v398
        %v400 = vrot.slane %v399, 1
        %v401 = vadd.f32 %v399, %v400
        %s402 = vtos %v401
        %s403 = ssub.f32 %s388, %s402
        %v404 = vrot.slane %v226, 7
        %v406 = vsel %vm392, %v404, 0.0
        %407 = vadd.xlane.f32.xlu0 %v406
        %v408 = vpop.xlane.xlu0 %407
        %v409 = vrot.slane %v408, 4
        %v410 = vadd.f32 %v408, %v409
        %v411 = vrot.slane %v410, 2
        %v412 = vadd.f32 %v410, %v411
        %v413 = vrot.slane %v412, 1
        %v414 = vadd.f32 %v412, %v413
        %s415 = vtos %v414
        %s416 = ssub.f32 %s303, %s415
        %v417 = vld [vmem:[%s221] sm:$0xff]
        %vm418 = vcmp.eq.s32.totalorder %v228, 0
        %v419 = vstv %s403
        %v420 = vsel %vm418, %v419, 0.0
        %vm421 = vcmp.eq.s32.totalorder %v228, 1
        %v422 = vstv %s416
        %v423 = vsel %vm421, %v422, 0.0
        %v424 = vadd.f32 %v420, %v423
        %vm425 = vcmp.eq.s32.totalorder %v228, 2
        %v426 = vstv %s348
        %v427 = vsel %vm425, %v426, 0.0
        %v428 = vadd.f32 %v424, %v427
        %vm429 = vcmp.eq.s32.totalorder %v228, 3
        %v430 = vstv %s363
        %v431 = vsel %vm429, %v430, 0.0
        %v432 = vadd.f32 %v428, %v431
        %v433 = vadd.f32 %v417, %v432
        %434 = vst [vmem:[%s221] sm:$0xff] %v433
        %s435 = sand.u32 %s98, 1
        %s436 = scalar_lea.sflag [#allocation6], %s435
        %s437 = sand.u32 %s98, 1
        %s438 = smul.addr %s437, 8
        %s439 = scalar_lea.vmem [#allocation9], %s438
        // Predicated region
        $region45: #{tpu_custom_call.1} parent=27 // pred_check
          %p440 = pneg %p108
        $region46: #{tpu_custom_call.1} parent=27 // pred_check_branch
          %442 = sbr.rel (%p440) target = $region48
        $region47: #{tpu_custom_call.1} parent=27 // pred_region
          %444 = vsyncadd %s436, 0
          %s445 = smul.addr %s26, 8
          %s446 = scalar_lea.hbm %s2, %s445
          %s448 = sshll.u32 %s439, 4
          %s449 = int_to_ptr.vmem [resolvable:$true] %s448
          %s450 = sshll.u32 %s446, 4
          %s451 = int_to_ptr.hbm [resolvable:$true] %s450
          %453 = dma.vmem_to_hbm [thread:$0]  %s449, 128, %s451, %s436
        $region48: #{tpu_custom_call.1} parent=27 // pred_fallthru
          _
      $region28: #{tpu_custom_call.1} parent=5 // pred_fallthru
        _
      %p454 = scmp.le.s32.totalorder 2, %s17
      // Predicated region
      $region49: #{tpu_custom_call.1} parent=5 // pred_check
        %p455 = pneg %p454
      $region50: #{tpu_custom_call.1} parent=5 // pred_check_branch
        %457 = sbr.rel (%p455) target = $region52
      $region51: #{tpu_custom_call.1} parent=5 // pred_region
        %s458 = ssub.s32 %s17, 2
        // Predicated region
        $region53: #{tpu_custom_call.1} parent=51 // pred_check
          %p459 = pneg %p114
        $region54: #{tpu_custom_call.1} parent=51 // pred_check_branch
          %461 = sbr.rel (%p459) target = $region56
        $region55: #{tpu_custom_call.1} parent=51 // pred_region
          %s462 = sand.u32 %s99, 1
          %s463 = scalar_lea.sflag [#allocation6], %s462
          %s464 = sand.u32 %s99, 1
          %s465 = smul.addr %s464, 8
          %s466 = scalar_lea.vmem [#allocation9], %s465
          %468 = dma.done %s463, 128
        $region56: #{tpu_custom_call.1} parent=51 // pred_fallthru
          _
      $region52: #{tpu_custom_call.1} parent=5 // pred_fallthru
        _
    $region6: #{tpu_custom_call.1} parent=1 // loop_footer
      %s21 = sadd.s32 1, %s17
    $region7: #{tpu_custom_call.1} parent=1 // loop_footer_branch
      %16 = sbr.rel target = $region3
    $region8: #{tpu_custom_call.1} parent=1 // loop_exit
      _
    %469 = vsyncpa [#allocation5], 1
    %s470 = scalar_lea.sflag [#allocation5], 1
    %471 = vsyncpa %s470, 1
    %472 = vsyncpa [#allocation8], 1
    %s473 = scalar_lea.sflag [#allocation8], 1
    %474 = vsyncpa %s473, 1
    %475 = vsyncpa [#allocation6], 1
    %s476 = scalar_lea.sflag [#allocation6], 1
    %477 = vsyncpa %s476, 1

</llo_original>
